<compile_context>
chip_gen: v6e
topology: v6e:2x2x1
jax: 0.10.0
libtpu: 0.0.40
codegen_flags: <defaults>
</compile_context>

<pallas_src>
import jax
import jax.numpy as jnp
from jax import lax
from jax.experimental import pallas as pl
from jax.experimental.pallas import tpu as pltpu


def _mlp_kernel(x_ref,     # VMEM [Sp, H]  bf16  prompt embeddings (resident, fetched once)
                w1t_ref,   # VMEM [tk, H]  int8  K-tile of W1^T rows (contiguous stream)
                s1_ref,    # VMEM [1, tk]  f32   per-intermediate-channel dequant scale
                b1_ref,    # VMEM [1, tk]  f32   bias1 tile
                w2_ref,    # VMEM [tk, H]  int8  K-tile of W2 rows (contiguous stream)
                o_ref):    # VMEM [Sp, H]  f32   partial output (resident across k)
    k = pl.program_id(1)

    # First matmul: contract H with W1^T's last dim (W1 pre-transposed on the host so
    # the streamed tile is a contiguous row slab).  int8 -> bf16 cast on the VPU; the
    # per-channel dequant scale is applied to the small [Sp, tk] result, not the tile.
    h = lax.dot_general(
        x_ref[...], w1t_ref[...].astype(jnp.bfloat16),
        dimension_numbers=(((1,), (1,)), ((), ())),
        preferred_element_type=jnp.float32)                      # [Sp, tk]
    # Per-K-tile bias1 + ReLU is exact: each tile's contraction over the full H is done.
    h = jnp.maximum(h * s1_ref[...] + b1_ref[...], 0.0)

    # Second matmul: this K-tile's contribution to the (pre-scale2) output.
    p = jnp.dot(h.astype(jnp.bfloat16), w2_ref[...].astype(jnp.bfloat16),
                preferred_element_type=jnp.float32)              # [Sp, H]

    @pl.when(k == 0)
    def _():
        o_ref[...] = p

    @pl.when(k > 0)
    def _():
        o_ref[...] += p


def _vmem_capacity_bytes():
    try:
        return int(pltpu.get_tpu_info().vmem_capacity_bytes)
    except Exception:
        return 64 << 20      # conservative (v7x-sized) fallback


def _pick_tk(hidden, vmem_cap):
    # tk=1024 only where VMEM is roomy (v5e/v6e: 128 MiB); cap at 512 on 64-MiB v7x.
    cands = (1024, 512, 256, 128) if vmem_cap >= (96 << 20) else (512, 256, 128)
    for c in cands:
        # 2 weight tiles x 2 pipeline buffers, int8: 4 * tk * hidden bytes.
        if hidden % c == 0 and 4 * c * hidden <= vmem_cap // 3:
            return c
    return 128


def prompt_encoder_forward(x, w1q_t, scale1, b1, w2q, scale2, b2, *, tk=None):
    """x: [S, H] prompt embeddings; w1q_t: [H, H] int8 (W1 transposed, quantized per
    intermediate channel); w2q: [H, H] int8 (quantized per output channel);
    scale1/b1/scale2/b2: [1, H] f32.  Returns [S, H] f32 encoded prompts."""
    seq, hidden = x.shape
    assert hidden % 128 == 0, "hidden must be a multiple of 128 (lane-dense); pad it"
    assert w1q_t.shape == (hidden, hidden) and w2q.shape == (hidden, hidden)
    assert scale1.shape == (1, hidden) and b1.shape == (1, hidden)
    assert scale2.shape == (1, hidden) and b2.shape == (1, hidden)

    # Pad S to a dense bf16 sublane multiple so activation/output tiles are unmasked.
    seq_p = max(16, ((seq + 15) // 16) * 16)
    xb = x.astype(jnp.bfloat16)
    if seq_p != seq:
        xb = jnp.pad(xb, ((0, seq_p - seq), (0, 0)))

    vmem_cap = _vmem_capacity_bytes()
    if tk is None:
        tk = _pick_tk(hidden, vmem_cap)
    assert hidden % tk == 0
    n_k = hidden // tk
    # Split the K reduction across a leading "parallel" axis: keeps both v7x TCs busy;
    # single-TC parts simply run the two halves back to back (negligible overhead).
    n_split = 2 if (n_k >= 2 and n_k % 2 == 0) else 1
    nk_inner = n_k // n_split

    def w_map(c, k):   # contiguous [tk, H] row-slab tile of W1^T / W2
        return (c * nk_inner + k, 0)

    def v_map(c, k):   # [1, tk] tile of scale1 / bias1
        return (0, c * nk_inner + k)

    grid_spec = pltpu.PrefetchScalarGridSpec(
        num_scalar_prefetch=0,
        grid=(n_split, nk_inner),
        in_specs=[
            pl.BlockSpec((seq_p, hidden), lambda c, k: (0, 0)),   # x (resident)
            pl.BlockSpec((tk, hidden), w_map),                    # W1^T row tile (int8)
            pl.BlockSpec((1, tk), v_map),                         # scale1 tile
            pl.BlockSpec((1, tk), v_map),                         # bias1 tile
            pl.BlockSpec((tk, hidden), w_map),                    # W2 row tile (int8)
        ],
        out_specs=pl.BlockSpec((None, seq_p, hidden), lambda c, k: (c, 0, 0)),
    )

    flops = 4 * seq_p * hidden * hidden
    bytes_accessed = (2 * hidden * hidden                 # W1 + W2 (int8)
                      + seq_p * hidden * 2                # x (bf16)
                      + n_split * seq_p * hidden * 4      # partial outputs (f32)
                      + 4 * hidden * 4)                   # scales + biases
    cost = pl.CostEstimate(flops=int(flops), transcendentals=0,
                           bytes_accessed=int(bytes_accessed))

    # Accurate (not double-hedged) VMEM estimate: streamed tiles are double-buffered,
    # constant-index blocks counted with their pipeline buffers too.
    vmem_est = (2 * 2 * tk * hidden            # W1^T + W2 tiles (int8), x2 buffers
                + 2 * 2 * tk * 4               # scale1 + bias1 tiles, x2 buffers
                + 2 * seq_p * hidden * 2       # x block buffers (bf16)
                + 2 * seq_p * hidden * 4)      # output block buffers (f32)
    vmem_limit = int(min(max(vmem_est + (4 << 20), 16 << 20), int(0.9 * vmem_cap)))

    partial = pl.pallas_call(
        _mlp_kernel,
        out_shape=jax.ShapeDtypeStruct((n_split, seq_p, hidden), jnp.float32),
        grid_spec=grid_spec,
        compiler_params=pltpu.CompilerParams(
            dimension_semantics=("parallel", "arbitrary"),   # K tiles are a reduction
            vmem_limit_bytes=vmem_limit,
        ),
        cost_estimate=cost,
    )(xb, w1q_t, scale1, b1, w2q)

    # Combine the K-split partials and apply the second dequant scale + bias2
    # (a tiny [S, H] epilogue that has to live outside the kernel for the 2-TC split).
    out = partial.sum(axis=0) * scale2 + b2
    return out[:seq]


def _quantize_int8_per_output_channel(w):
    """Symmetric per-output-column int8 quantization: w ~= q * scale (broadcast over rows)."""
    amax = jnp.max(jnp.abs(w), axis=0, keepdims=True)          # [1, out]
    scale = jnp.maximum(amax, 1e-8) / 127.0
    q = jnp.clip(jnp.round(w / scale), -127.0, 127.0).astype(jnp.int8)
    return q, scale.astype(jnp.float32)


class PromptEncoderPallas:
    """Minimal concrete stand-in for AbstractPromptEncoder (deterministic init)."""

    def __init__(self, hidden_size, spell_length, key):
        assert hidden_size % 128 == 0, "pad hidden_size to a multiple of 128"
        self.hidden_size = hidden_size
        self.spell_length = spell_length
        self._name = "pallas_prompt_encoder"
        k_emb, k_w1, k_b1, k_w2, k_b2 = jax.random.split(key, 5)
        scale = 1.0 / jnp.sqrt(hidden_size)
        # nn.Embedding(spell_length, hidden_size)
        self.embedding = jax.random.normal(k_emb, (spell_length, hidden_size),
                                           jnp.float32) * 0.02
        # mlp_head = Linear(H,H) -> ReLU -> Linear(H,H); weights stored int8 + f32 scales.
        w1f = jax.random.uniform(k_w1, (hidden_size, hidden_size), jnp.float32, -scale, scale)
        w2f = jax.random.uniform(k_w2, (hidden_size, hidden_size), jnp.float32, -scale, scale)
        self.b1 = jax.random.uniform(k_b1, (1, hidden_size), jnp.float32, -scale, scale)
        self.b2 = jax.random.uniform(k_b2, (1, hidden_size), jnp.float32, -scale, scale)
        w1q, s1 = _quantize_int8_per_output_channel(w1f)
        w2q, s2 = _quantize_int8_per_output_channel(w2f)
        self.w1q_t = jnp.asarray(w1q.T)      # [K, H_in] int8: contiguous K-row tiles
        self.scale1 = s1                     # [1, H]
        self.w2q = w2q                       # [K, H_out] int8: contiguous K-row tiles
        self.scale2 = s2                     # [1, H]

    @property
    def name(self):
        return self._name

    def forward(self, tokens=None, embeddings=None):
        if embeddings is not None:
            # Direct-embedding path: run the MLP head on the provided rows.
            x = embeddings.astype(jnp.float32)
        else:
            x = jnp.take(self.embedding, tokens.astype(jnp.int32), axis=0)
        return prompt_encoder_forward(x, self.w1q_t, self.scale1, self.b1,
                                      self.w2q, self.scale2, self.b2)


def _reference(enc, tokens):
    # Pure-JAX reference mirroring the kernel's numerics (int8 dequant, bf16 activations,
    # f32 accumulation).
    x = jnp.take(enc.embedding, tokens, axis=0)
    xb = x.astype(jnp.bfloat16).astype(jnp.float32)
    w1 = enc.w1q_t.astype(jnp.float32).T           # [H_in, K], integer-valued
    h = jnp.maximum((xb @ w1) * enc.scale1 + enc.b1, 0.0)
    hb = h.astype(jnp.bfloat16).astype(jnp.float32)
    w2 = enc.w2q.astype(jnp.float32)
    return (hb @ w2) * enc.scale2 + enc.b2


if __name__ == "__main__":
    key = jax.random.PRNGKey(0)
    hidden_size = 512          # lane-dense hidden (a toy H=32 would be padded up)
    spell_length = 8           # number of prompt (pseudo) tokens

    enc = PromptEncoderPallas(hidden_size, spell_length, key)
    tokens = jnp.arange(spell_length, dtype=jnp.int32)

    out = jax.block_until_ready(enc.forward(tokens=tokens))
    ref = _reference(enc, tokens)
    assert out.shape == (spell_length, hidden_size)
    assert jnp.allclose(out, ref, atol=1e-2, rtol=1e-2), \
        float(jnp.max(jnp.abs(out - ref)))

    # Also exercise the multi-K-step accumulate path and the 2-way parallel K split.
    x = jnp.take(enc.embedding, tokens, axis=0)
    out_split = jax.block_until_ready(
        prompt_encoder_forward(x, enc.w1q_t, enc.scale1, enc.b1,
                               enc.w2q, enc.scale2, enc.b2, tk=128))
    assert jnp.allclose(out_split, ref, atol=1e-2, rtol=1e-2), \
        float(jnp.max(jnp.abs(out_split - ref)))

    print("KERNEL_OK")
</pallas_src>

<mosaic_0001>
module attributes {stable_mosaic.version = 11 : i64} {
  func.func @_mlp_kernel(%arg0: i32, %arg1: i32, %arg2: memref<16x512xbf16, #tpu.memory_space<vmem>>, %arg3: memref<512x512xi8, #tpu.memory_space<vmem>>, %arg4: memref<1x512xf32, #tpu.memory_space<vmem>>, %arg5: memref<1x512xf32, #tpu.memory_space<vmem>>, %arg6: memref<512x512xi8, #tpu.memory_space<vmem>>, %arg7: memref<1x16x512xf32, #tpu.memory_space<vmem>>) attributes {dimension_semantics = [#tpu.dimension_semantics<parallel>, #tpu.dimension_semantics<arbitrary>], iteration_bounds = array<i64: 1, 1>, scalar_prefetch = 0 : i64, scratch_operands = 0 : i64, tpu.core_type = #tpu.core_type<tc>, window_params = [{pipeline_mode = #tpu.pipeline_mode<synchronous>, transform_indices = @transform_0, window_bounds = array<i64: 16, 512>}, {transform_indices = @transform_1, window_bounds = array<i64: 512, 512>}, {transform_indices = @transform_2, window_bounds = array<i64: 1, 512>}, {transform_indices = @transform_3, window_bounds = array<i64: 1, 512>}, {transform_indices = @transform_4, window_bounds = array<i64: 512, 512>}, {transform_indices = @transform_5, window_bounds = array<i64: 1, 16, 512>}]} {
    %c0 = arith.constant 0 : index
    %c0_0 = arith.constant 0 : index
    %0 = vector.load %arg2[%c0, %c0_0] : memref<16x512xbf16, #tpu.memory_space<vmem>>, vector<16x512xbf16>
    %c0_1 = arith.constant 0 : index
    %c0_2 = arith.constant 0 : index
    %1 = vector.load %arg3[%c0_1, %c0_2] : memref<512x512xi8, #tpu.memory_space<vmem>>, vector<512x512xi8>
    %2 = arith.sitofp %1 : vector<512x512xi8> to vector<512x512xbf16>
    %cst = arith.constant dense<0.000000e+00> : vector<16x512xf32>
    %3 = tpu.matmul %0, %2, %cst {dimension_numbers = #tpu.dot_dimension_numbers<[1], [1], [0], [0], [0, 0, 1, 0], [], []>} : vector<16x512xbf16>, vector<512x512xbf16>, vector<16x512xf32> -> vector<16x512xf32>
    %c0_3 = arith.constant 0 : index
    %c0_4 = arith.constant 0 : index
    %4 = vector.load %arg4[%c0_3, %c0_4] : memref<1x512xf32, #tpu.memory_space<vmem>>, vector<1x512xf32>
    %5 = vector.broadcast %4 : vector<1x512xf32> to vector<16x512xf32>
    %6 = arith.mulf %3, %5 : vector<16x512xf32>
    %c0_5 = arith.constant 0 : index
    %c0_6 = arith.constant 0 : index
    %7 = vector.load %arg5[%c0_5, %c0_6] : memref<1x512xf32, #tpu.memory_space<vmem>>, vector<1x512xf32>
    %8 = vector.broadcast %7 : vector<1x512xf32> to vector<16x512xf32>
    %9 = arith.addf %6, %8 : vector<16x512xf32>
    %cst_7 = arith.constant 0.000000e+00 : f32
    %10 = vector.broadcast %cst_7 : f32 to vector<16x512xf32>
    %11 = arith.maximumf %9, %10 : vector<16x512xf32>
    %12 = arith.truncf %11 : vector<16x512xf32> to vector<16x512xbf16>
    %c0_8 = arith.constant 0 : index
    %c0_9 = arith.constant 0 : index
    %13 = vector.load %arg6[%c0_8, %c0_9] : memref<512x512xi8, #tpu.memory_space<vmem>>, vector<512x512xi8>
    %14 = arith.sitofp %13 : vector<512x512xi8> to vector<512x512xbf16>
    %cst_10 = arith.constant dense<0.000000e+00> : vector<16x512xf32>
    %15 = tpu.matmul %12, %14, %cst_10 {dimension_numbers = #tpu.dot_dimension_numbers<[1], [0], [0], [1], [0, 0, 1, 1], [], []>} : vector<16x512xbf16>, vector<512x512xbf16>, vector<16x512xf32> -> vector<16x512xf32>
    %c0_i32 = arith.constant 0 : i32
    %16 = arith.cmpi eq, %arg1, %c0_i32 : i32
    %17 = arith.extui %16 : i1 to i32
    %c0_i32_11 = arith.constant 0 : i32
    %18 = arith.cmpi ne, %17, %c0_i32_11 : i32
    scf.if %18 {
      %c0_14 = arith.constant 0 : index
      %c0_15 = arith.constant 0 : index
      %c0_16 = arith.constant 0 : index
      %22 = vector.load %arg7[%c0_14, %c0_15, %c0_16] : memref<1x16x512xf32, #tpu.memory_space<vmem>>, vector<1x16x512xf32>
      %23 = vector.shape_cast %22 : vector<1x16x512xf32> to vector<16x512xf32>
      %24 = vector.shape_cast %15 : vector<16x512xf32> to vector<1x16x512xf32>
      tpu.vector_store %arg7[%c0_14, %c0_15, %c0_16], %24 {strides = array<i32>} : memref<1x16x512xf32, #tpu.memory_space<vmem>>, vector<1x16x512xf32>,
    } else {
    }
    %c0_i32_12 = arith.constant 0 : i32
    %19 = arith.cmpi sgt, %arg1, %c0_i32_12 : i32
    %20 = arith.extui %19 : i1 to i32
    %c0_i32_13 = arith.constant 0 : i32
    %21 = arith.cmpi ne, %20, %c0_i32_13 : i32
    scf.if %21 {
      %c0_14 = arith.constant 0 : index
      %c0_15 = arith.constant 0 : index
      %c0_16 = arith.constant 0 : index
      %22 = vector.load %arg7[%c0_14, %c0_15, %c0_16] : memref<1x16x512xf32, #tpu.memory_space<vmem>>, vector<1x16x512xf32>
      %23 = vector.shape_cast %22 : vector<1x16x512xf32> to vector<16x512xf32>
      %24 = arith.addf %23, %15 : vector<16x512xf32>
      %c0_17 = arith.constant 0 : index
      %c0_18 = arith.constant 0 : index
      %c0_19 = arith.constant 0 : index
      %25 = vector.load %arg7[%c0_17, %c0_18, %c0_19] : memref<1x16x512xf32, #tpu.memory_space<vmem>>, vector<1x16x512xf32>
      %26 = vector.shape_cast %25 : vector<1x16x512xf32> to vector<16x512xf32>
      %27 = vector.shape_cast %24 : vector<16x512xf32> to vector<1x16x512xf32>
      tpu.vector_store %arg7[%c0_17, %c0_18, %c0_19], %27 {strides = array<i32>} : memref<1x16x512xf32, #tpu.memory_space<vmem>>, vector<1x16x512xf32>,
    } else {
    }
    return
  }
  func.func @transform_0(%arg0: i32, %arg1: i32) -> (i32, i32) {
    %c0_i32 = arith.constant 0 : i32
    %c0_i32_0 = arith.constant 0 : i32
    %c0_i32_1 = arith.constant 0 : i32
    return %c0_i32, %c0_i32_0 : i32, i32
  }
  func.func @transform_1(%arg0: i32, %arg1: i32) -> (i32, i32) {
    %c1_i32 = arith.constant 1 : i32
    %0 = arith.muli %arg0, %c1_i32 : i32
    %1 = arith.addi %0, %arg1 : i32
    %c0_i32 = arith.constant 0 : i32
    %c0_i32_0 = arith.constant 0 : i32
    return %1, %c0_i32 : i32, i32
  }
  func.func @transform_2(%arg0: i32, %arg1: i32) -> (i32, i32) {
    %c1_i32 = arith.constant 1 : i32
    %0 = arith.muli %arg0, %c1_i32 : i32
    %1 = arith.addi %0, %arg1 : i32
    %c0_i32 = arith.constant 0 : i32
    %c0_i32_0 = arith.constant 0 : i32
    return %c0_i32, %1 : i32, i32
  }
  func.func @transform_3(%arg0: i32, %arg1: i32) -> (i32, i32) {
    %c1_i32 = arith.constant 1 : i32
    %0 = arith.muli %arg0, %c1_i32 : i32
    %1 = arith.addi %0, %arg1 : i32
    %c0_i32 = arith.constant 0 : i32
    %c0_i32_0 = arith.constant 0 : i32
    return %c0_i32, %1 : i32, i32
  }
  func.func @transform_4(%arg0: i32, %arg1: i32) -> (i32, i32) {
    %c1_i32 = arith.constant 1 : i32
    %0 = arith.muli %arg0, %c1_i32 : i32
    %1 = arith.addi %0, %arg1 : i32
    %c0_i32 = arith.constant 0 : i32
    %c0_i32_0 = arith.constant 0 : i32
    return %1, %c0_i32 : i32, i32
  }
  func.func @transform_5(%arg0: i32, %arg1: i32) -> (i32, i32, i32) {
    %c0_i32 = arith.constant 0 : i32
    %c0_i32_0 = arith.constant 0 : i32
    %c0_i32_1 = arith.constant 0 : i32
    return %arg0, %c0_i32, %c0_i32_0 : i32, i32, i32
  }
}

</mosaic_0001>

<llo_original>
// kernel: tpu_custom_call.1
$region0: #{tpu_custom_call.1}
  #allocation0 [shape = 'u32[]', space=smem, size = 0x4, offset = 0x4, fixed_abs, tag = 'smem constant byte address 0x4 - core index']
  #allocation1 [shape = 'u32[144,128]{1,0:T(1,128)}', space=vmem, size = 0x12000, scoped, tag = 'internal scratch']
  %s0 = inlined_call_operand.hbm [shape: bf16[16,512], index: 0, kind: input, shape index: {}]
  %s1 = inlined_call_operand.hbm [shape: s8[512,512], index: 1, kind: input, shape index: {}]
  %s2 = inlined_call_operand.hbm [shape: f32[1,512], index: 2, kind: input, shape index: {}]
  %s3 = inlined_call_operand.vmem [shape: f32[1,512], index: 3, kind: input, shape index: {}]
  %s4 = inlined_call_operand.hbm [shape: s8[512,512], index: 4, kind: input, shape index: {}]
  %s5 = inlined_call_operand.hbm [shape: f32[1,16,512], index: 5, kind: output, shape index: {}]
  %s6 = sld [smem:[#allocation0]]
  $region54: #{tpu_custom_call.1} parent=0
    _
  %s8 = ssub.s32 1, %s6
  %s9 = scalar_select 0, %s8, %s6
  $region1: #{tpu_custom_call.1} parent=0
    #allocation2 [shape = 'u8[16384]{0}', space=vmem, size = 0x4000, scoped, tag = 'input window, operand 0, single buffered']
    #allocation3 [shape = 's32[1]{0}', space=sflag, size = 0x4, scoped, tag = 'scoped memory for tpu_custom_call.1']
    #allocation4 [shape = 's32[1]{0}', space=sflag, size = 0x4, scoped, tag = 'scoped memory for tpu_custom_call.1']
    #allocation5 [shape = 'u8[262144]{0}', space=vmem, size = 0x40000, scoped, tag = 'input window, operand 1, single buffered']
    #allocation6 [shape = 's32[1]{0}', space=sflag, size = 0x4, scoped, tag = 'scoped memory for tpu_custom_call.1']
    #allocation7 [shape = 'u8[2048]{0}', space=vmem, size = 0x800, scoped, tag = 'input window, operand 2, single buffered']
    #allocation8 [shape = 'u8[262144]{0}', space=vmem, size = 0x40000, scoped, tag = 'input window, operand 4, single buffered']
    #allocation9 [shape = 's32[1]{0}', space=sflag, size = 0x4, scoped, tag = 'scoped memory for tpu_custom_call.1']
    #allocation10 [shape = 'u8[32768]{0}', space=vmem, size = 0x8000, scoped, tag = 'output window, operand 0, single buffered']
    %10 = vsyncpa [#allocation3], 0
    %11 = vsyncpa [#allocation6], 0
    %12 = vsyncpa [#allocation9], 0
    %13 = vsyncpa [#allocation4], 0
    // Predicated region
    $region2: #{tpu_custom_call.1} parent=1 // pred_check
      _
    $region3: #{tpu_custom_call.1} parent=1 // pred_check_branch
      %15 = sbr.rel (0) target = $region5
    $region4: #{tpu_custom_call.1} parent=1 // pred_region
      %s17 = ssub.s32 512, 512
      %18 = vsyncadd [#allocation3], %s17
      %s19 = sshll.u32 [#allocation2], 4
      %s20 = int_to_ptr.vmem [resolvable:$true] %s19
      %25 = dma.hbm_to_vmem [thread:$0]  %s0, 512, %s20, [#allocation3], 256, 256, 16
    $region5: #{tpu_custom_call.1} parent=1 // pred_fallthru
      _
    // Predicated region
    $region6: #{tpu_custom_call.1} parent=1 // pred_check
      _
    $region7: #{tpu_custom_call.1} parent=1 // pred_check_branch
      %27 = sbr.rel (0) target = $region9
    $region8: #{tpu_custom_call.1} parent=1 // pred_region
      %s28 = sadd.s32 0, 0
      %s29 = smul.u32 16, %s28
      %s31 = ssub.s32 8192, 8192
      %32 = vsyncadd [#allocation6], %s31
      %s33 = smul.addr %s29, 4
      %s34 = smul.addr %s33, 128
      %s35 = scalar_lea.hbm %s1, %s34
      %s36 = sshll.u32 [#allocation5], 4
      %s37 = int_to_ptr.vmem [resolvable:$true] %s36
      %42 = dma.hbm_to_vmem [thread:$0]  %s35, 8192, %s37, [#allocation6], 512, 512, 32
    $region9: #{tpu_custom_call.1} parent=1 // pred_fallthru
      _
    // Predicated region
    $region10: #{tpu_custom_call.1} parent=1 // pred_check
      _
    $region11: #{tpu_custom_call.1} parent=1 // pred_check_branch
      %44 = sbr.rel (0) target = $region13
    $region12: #{tpu_custom_call.1} parent=1 // pred_region
      %s45 = sadd.s32 0, 0
      %s46 = smul.u32 4, %s45
      %s48 = ssub.s32 64, 64
      %49 = vsyncadd [#allocation6], %s48
      %s50 = smul.addr %s46, 16
      %s51 = scalar_lea.hbm %s2, %s50
      %s53 = sshll.u32 [#allocation7], 4
      %s54 = int_to_ptr.vmem [resolvable:$true] %s53
      %56 = dma.hbm_to_vmem [thread:$0]  %s51, 64, %s54, [#allocation6]
    $region13: #{tpu_custom_call.1} parent=1 // pred_fallthru
      _
    // Predicated region
    $region14: #{tpu_custom_call.1} parent=1 // pred_check
      _
    $region15: #{tpu_custom_call.1} parent=1 // pred_check_branch
      %58 = sbr.rel (0) target = $region17
    $region16: #{tpu_custom_call.1} parent=1 // pred_region
      %s59 = sadd.s32 0, 0
      %s60 = smul.u32 4, %s59
      %p61 = scmp.lt.s32.totalorder %s60, 3
      %s62 = scalar_select %p61, %s60, 3
      %s63 = scalar_lea.vmem %s3, %s62
      %s64 = sadd.s32 0, 0
      %s65 = smul.u32 4, %s64
    $region17: #{tpu_custom_call.1} parent=1 // pred_fallthru
      _
    // Predicated region
    $region18: #{tpu_custom_call.1} parent=1 // pred_check
      _
    $region19: #{tpu_custom_call.1} parent=1 // pred_check_branch
      %67 = sbr.rel (0) target = $region21
    $region20: #{tpu_custom_call.1} parent=1 // pred_region
      %s68 = sadd.s32 0, 0
      %s69 = smul.u32 16, %s68
      %s71 = ssub.s32 8192, 8192
      %72 = vsyncadd [#allocation9], %s71
      %s73 = smul.addr %s69, 4
      %s74 = smul.addr %s73, 128
      %s75 = scalar_lea.hbm %s4, %s74
      %s76 = sshll.u32 [#allocation8], 4
      %s77 = int_to_ptr.vmem [resolvable:$true] %s76
      %82 = dma.hbm_to_vmem [thread:$0]  %s75, 8192, %s77, [#allocation9], 512, 512, 32
    $region21: #{tpu_custom_call.1} parent=1 // pred_fallthru
      _
    // Predicated region
    $region22: #{tpu_custom_call.1} parent=1 // pred_check
      _
    $region23: #{tpu_custom_call.1} parent=1 // pred_check_branch
      %84 = sbr.rel (0) target = $region25
    $region24: #{tpu_custom_call.1} parent=1 // pred_region
      %85 = dma.done [#allocation3], 512
    $region25: #{tpu_custom_call.1} parent=1 // pred_fallthru
      _
    // Predicated region
    $region26: #{tpu_custom_call.1} parent=1 // pred_check
      _
    $region27: #{tpu_custom_call.1} parent=1 // pred_check_branch
      %87 = sbr.rel (0) target = $region29
    $region28: #{tpu_custom_call.1} parent=1 // pred_region
      %88 = dma.done [#allocation6], 8192
    $region29: #{tpu_custom_call.1} parent=1 // pred_fallthru
      _
    // Predicated region
    $region30: #{tpu_custom_call.1} parent=1 // pred_check
      _
    $region31: #{tpu_custom_call.1} parent=1 // pred_check_branch
      %90 = sbr.rel (0) target = $region33
    $region32: #{tpu_custom_call.1} parent=1 // pred_region
      %91 = dma.done [#allocation6], 64
    $region33: #{tpu_custom_call.1} parent=1 // pred_fallthru
      _
    // Predicated region
    $region34: #{tpu_custom_call.1} parent=1 // pred_check
      _
    $region35: #{tpu_custom_call.1} parent=1 // pred_check_branch
      %93 = sbr.rel (0) target = $region37
    $region36: #{tpu_custom_call.1} parent=1 // pred_region
      %94 = dma.done [#allocation9], 8192
    $region37: #{tpu_custom_call.1} parent=1 // pred_fallthru
      _
    %s95 = sadd.s32 0, 0
    %s96 = smul.u32 4, %s95
    %p97 = scmp.lt.s32.totalorder %s96, 3
    %s98 = scalar_select %p97, %s96, 3
    %s99 = scalar_lea.vmem %s3, %s98
    %s100 = sadd.s32 0, 0
    %s101 = smul.u32 16, %s100
    %s102 = sadd.s32 0, 0
    %s103 = smul.u32 4, %s102
    %s104 = sadd.s32 0, 0
    %s105 = smul.u32 4, %s104
    %p106 = scmp.lt.s32.totalorder %s105, 3
    %s107 = scalar_select %p106, %s105, 3
    %s108 = scalar_lea.vmem %s3, %s107
    %s109 = sadd.s32 0, 0
    %s110 = smul.u32 4, %s109
    %s111 = sadd.s32 0, 0
    %s112 = smul.u32 16, %s111
    %v113 = vld [vmem:[#allocation2] sm:$0xff]
    %v114 = vld [vmem:[#allocation2 + $0x8] sm:$0xff]
    %v115 = vld [vmem:[#allocation2 + $0x10] sm:$0xff]
    %v116 = vld [vmem:[#allocation2 + $0x18] sm:$0xff]
    %v117 = vld [vmem:[#allocation5] sm:$0xff]
    %v118 = vld [vmem:[#allocation5 + $0x8] sm:$0xff]
    %v119 = vld [vmem:[#allocation5 + $0x10] sm:$0xff]
    %v120 = vld [vmem:[#allocation5 + $0x18] sm:$0xff]
    %v121 = vld [vmem:[#allocation5 + $0x20] sm:$0xff]
    %v122 = vld [vmem:[#allocation5 + $0x28] sm:$0xff]
    %v123 = vld [vmem:[#allocation5 + $0x30] sm:$0xff]
    %v124 = vld [vmem:[#allocation5 + $0x38] sm:$0xff]
    %v125 = vld [vmem:[#allocation5 + $0x40] sm:$0xff]
    %v126 = vld [vmem:[#allocation5 + $0x48] sm:$0xff]
    %v127 = vld [vmem:[#allocation5 + $0x50] sm:$0xff]
    %v128 = vld [vmem:[#allocation5 + $0x58] sm:$0xff]
    %v129 = vld [vmem:[#allocation5 + $0x60] sm:$0xff]
    %v130 = vld [vmem:[#allocation5 + $0x68] sm:$0xff]
    %v131 = vld [vmem:[#allocation5 + $0x70] sm:$0xff]
    %v132 = vld [vmem:[#allocation5 + $0x78] sm:$0xff]
    %v133 = vld [vmem:[#allocation5 + $0x80] sm:$0xff]
    %v134 = vld [vmem:[#allocation5 + $0x88] sm:$0xff]
    %v135 = vld [vmem:[#allocation5 + $0x90] sm:$0xff]
    %v136 = vld [vmem:[#allocation5 + $0x98] sm:$0xff]
    %v137 = vld [vmem:[#allocation5 + $0xa0] sm:$0xff]
    %v138 = vld [vmem:[#allocation5 + $0xa8] sm:$0xff]
    %v139 = vld [vmem:[#allocation5 + $0xb0] sm:$0xff]
    %v140 = vld [vmem:[#allocation5 + $0xb8] sm:$0xff]
    %v141 = vld [vmem:[#allocation5 + $0xc0] sm:$0xff]
    %v142 = vld [vmem:[#allocation5 + $0xc8] sm:$0xff]
    %v143 = vld [vmem:[#allocation5 + $0xd0] sm:$0xff]
    %v144 = vld [vmem:[#allocation5 + $0xd8] sm:$0xff]
    %v145 = vld [vmem:[#allocation5 + $0xe0] sm:$0xff]
    %v146 = vld [vmem:[#allocation5 + $0xe8] sm:$0xff]
    %v147 = vld [vmem:[#allocation5 + $0xf0] sm:$0xff]
    %v148 = vld [vmem:[#allocation5 + $0xf8] sm:$0xff]
    %v149 = vld [vmem:[#allocation5 + $0x100] sm:$0xff]
    %v150 = vld [vmem:[#allocation5 + $0x108] sm:$0xff]
    %v151 = vld [vmem:[#allocation5 + $0x110] sm:$0xff]
    %v152 = vld [vmem:[#allocation5 + $0x118] sm:$0xff]
    %v153 = vld [vmem:[#allocation5 + $0x120] sm:$0xff]
    %v154 = vld [vmem:[#allocation5 + $0x128] sm:$0xff]
    %v155 = vld [vmem:[#allocation5 + $0x130] sm:$0xff]
    %v156 = vld [vmem:[#allocation5 + $0x138] sm:$0xff]
    %v157 = vld [vmem:[#allocation5 + $0x140] sm:$0xff]
    %v158 = vld [vmem:[#allocation5 + $0x148] sm:$0xff]
    %v159 = vld [vmem:[#allocation5 + $0x150] sm:$0xff]
    %v160 = vld [vmem:[#allocation5 + $0x158] sm:$0xff]
    %v161 = vld [vmem:[#allocation5 + $0x160] sm:$0xff]
    %v162 = vld [vmem:[#allocation5 + $0x168] sm:$0xff]
    %v163 = vld [vmem:[#allocation5 + $0x170] sm:$0xff]
    %v164 = vld [vmem:[#allocation5 + $0x178] sm:$0xff]
    %v165 = vld [vmem:[#allocation5 + $0x180] sm:$0xff]
    %v166 = vld [vmem:[#allocation5 + $0x188] sm:$0xff]
    %v167 = vld [vmem:[#allocation5 + $0x190] sm:$0xff]
    %v168 = vld [vmem:[#allocation5 + $0x198] sm:$0xff]
    %v169 = vld [vmem:[#allocation5 + $0x1a0] sm:$0xff]
    %v170 = vld [vmem:[#allocation5 + $0x1a8] sm:$0xff]
    %v171 = vld [vmem:[#allocation5 + $0x1b0] sm:$0xff]
    %v172 = vld [vmem:[#allocation5 + $0x1b8] sm:$0xff]
    %v173 = vld [vmem:[#allocation5 + $0x1c0] sm:$0xff]
    %v174 = vld [vmem:[#allocation5 + $0x1c8] sm:$0xff]
    %v175 = vld [vmem:[#allocation5 + $0x1d0] sm:$0xff]
    %v176 = vld [vmem:[#allocation5 + $0x1d8] sm:$0xff]
    %v177 = vld [vmem:[#allocation5 + $0x1e0] sm:$0xff]
    %v178 = vld [vmem:[#allocation5 + $0x1e8] sm:$0xff]
    %v179 = vld [vmem:[#allocation5 + $0x1f0] sm:$0xff]
    %v180 = vld [vmem:[#allocation5 + $0x1f8] sm:$0xff]
    %v181 = vunpack.c.l.s8.bf16 %v117
    %v182 = vunpack.c.l.s8.bf16 %v118
    %v183 = vunpack.c.l.s8.bf16 %v119
    %v184 = vunpack.c.l.s8.bf16 %v120
    %v185 = vunpack.c.h.s8.bf16 %v117
    %v186 = vunpack.c.h.s8.bf16 %v118
    %v187 = vunpack.c.h.s8.bf16 %v119
    %v188 = vunpack.c.h.s8.bf16 %v120
    %v189 = vunpack.c.l.s8.bf16 %v121
    %v190 = vunpack.c.l.s8.bf16 %v122
    %v191 = vunpack.c.l.s8.bf16 %v123
    %v192 = vunpack.c.l.s8.bf16 %v124
    %v193 = vunpack.c.h.s8.bf16 %v121
    %v194 = vunpack.c.h.s8.bf16 %v122
    %v195 = vunpack.c.h.s8.bf16 %v123
    %v196 = vunpack.c.h.s8.bf16 %v124
    %v197 = vunpack.c.l.s8.bf16 %v125
    %v198 = vunpack.c.l.s8.bf16 %v126
    %v199 = vunpack.c.l.s8.bf16 %v127
    %v200 = vunpack.c.l.s8.bf16 %v128
    %v201 = vunpack.c.h.s8.bf16 %v125
    %v202 = vunpack.c.h.s8.bf16 %v126
    %v203 = vunpack.c.h.s8.bf16 %v127
    %v204 = vunpack.c.h.s8.bf16 %v128
    %v205 = vunpack.c.l.s8.bf16 %v129
    %v206 = vunpack.c.l.s8.bf16 %v130
    %v207 = vunpack.c.l.s8.bf16 %v131
    %v208 = vunpack.c.l.s8.bf16 %v132
    %v209 = vunpack.c.h.s8.bf16 %v129
    %v210 = vunpack.c.h.s8.bf16 %v130
    %v211 = vunpack.c.h.s8.bf16 %v131
    %v212 = vunpack.c.h.s8.bf16 %v132
    %v213 = vunpack.c.l.s8.bf16 %v133
    %v214 = vunpack.c.l.s8.bf16 %v134
    %v215 = vunpack.c.l.s8.bf16 %v135
    %v216 = vunpack.c.l.s8.bf16 %v136
    %v217 = vunpack.c.h.s8.bf16 %v133
    %v218 = vunpack.c.h.s8.bf16 %v134
    %v219 = vunpack.c.h.s8.bf16 %v135
    %v220 = vunpack.c.h.s8.bf16 %v136
    %v221 = vunpack.c.l.s8.bf16 %v137
    %v222 = vunpack.c.l.s8.bf16 %v138
    %v223 = vunpack.c.l.s8.bf16 %v139
    %v224 = vunpack.c.l.s8.bf16 %v140
    %v225 = vunpack.c.h.s8.bf16 %v137
    %v226 = vunpack.c.h.s8.bf16 %v138
    %v227 = vunpack.c.h.s8.bf16 %v139
    %v228 = vunpack.c.h.s8.bf16 %v140
    %v229 = vunpack.c.l.s8.bf16 %v141
    %v230 = vunpack.c.l.s8.bf16 %v142
    %v231 = vunpack.c.l.s8.bf16 %v143
    %v232 = vunpack.c.l.s8.bf16 %v144
    %v233 = vunpack.c.h.s8.bf16 %v141
    %v234 = vunpack.c.h.s8.bf16 %v142
    %v235 = vunpack.c.h.s8.bf16 %v143
    %v236 = vunpack.c.h.s8.bf16 %v144
    %v237 = vunpack.c.l.s8.bf16 %v145
    %v238 = vunpack.c.l.s8.bf16 %v146
    %v239 = vunpack.c.l.s8.bf16 %v147
    %v240 = vunpack.c.l.s8.bf16 %v148
    %v241 = vunpack.c.h.s8.bf16 %v145
    %v242 = vunpack.c.h.s8.bf16 %v146
    %v243 = vunpack.c.h.s8.bf16 %v147
    %v244 = vunpack.c.h.s8.bf16 %v148
    %v245 = vunpack.c.l.s8.bf16 %v149
    %v246 = vunpack.c.l.s8.bf16 %v150
    %v247 = vunpack.c.l.s8.bf16 %v151
    %v248 = vunpack.c.l.s8.bf16 %v152
    %v249 = vunpack.c.h.s8.bf16 %v149
    %v250 = vunpack.c.h.s8.bf16 %v150
    %v251 = vunpack.c.h.s8.bf16 %v151
    %v252 = vunpack.c.h.s8.bf16 %v152
    %v253 = vunpack.c.l.s8.bf16 %v153
    %v254 = vunpack.c.l.s8.bf16 %v154
    %v255 = vunpack.c.l.s8.bf16 %v155
    %v256 = vunpack.c.l.s8.bf16 %v156
    %v257 = vunpack.c.h.s8.bf16 %v153
    %v258 = vunpack.c.h.s8.bf16 %v154
    %v259 = vunpack.c.h.s8.bf16 %v155
    %v260 = vunpack.c.h.s8.bf16 %v156
    %v261 = vunpack.c.l.s8.bf16 %v157
    %v262 = vunpack.c.l.s8.bf16 %v158
    %v263 = vunpack.c.l.s8.bf16 %v159
    %v264 = vunpack.c.l.s8.bf16 %v160
    %v265 = vunpack.c.h.s8.bf16 %v157
    %v266 = vunpack.c.h.s8.bf16 %v158
    %v267 = vunpack.c.h.s8.bf16 %v159
    %v268 = vunpack.c.h.s8.bf16 %v160
    %v269 = vunpack.c.l.s8.bf16 %v161
    %v270 = vunpack.c.l.s8.bf16 %v162
    %v271 = vunpack.c.l.s8.bf16 %v163
    %v272 = vunpack.c.l.s8.bf16 %v164
    %v273 = vunpack.c.h.s8.bf16 %v161
    %v274 = vunpack.c.h.s8.bf16 %v162
    %v275 = vunpack.c.h.s8.bf16 %v163
    %v276 = vunpack.c.h.s8.bf16 %v164
    %v277 = vunpack.c.l.s8.bf16 %v165
    %v278 = vunpack.c.l.s8.bf16 %v166
    %v279 = vunpack.c.l.s8.bf16 %v167
    %v280 = vunpack.c.l.s8.bf16 %v168
    %v281 = vunpack.c.h.s8.bf16 %v165
    %v282 = vunpack.c.h.s8.bf16 %v166
    %v283 = vunpack.c.h.s8.bf16 %v167
    %v284 = vunpack.c.h.s8.bf16 %v168
    %v285 = vunpack.c.l.s8.bf16 %v169
    %v286 = vunpack.c.l.s8.bf16 %v170
    %v287 = vunpack.c.l.s8.bf16 %v171
    %v288 = vunpack.c.l.s8.bf16 %v172
    %v289 = vunpack.c.h.s8.bf16 %v169
    %v290 = vunpack.c.h.s8.bf16 %v170
    %v291 = vunpack.c.h.s8.bf16 %v171
    %v292 = vunpack.c.h.s8.bf16 %v172
    %v293 = vunpack.c.l.s8.bf16 %v173
    %v294 = vunpack.c.l.s8.bf16 %v174
    %v295 = vunpack.c.l.s8.bf16 %v175
    %v296 = vunpack.c.l.s8.bf16 %v176
    %v297 = vunpack.c.h.s8.bf16 %v173
    %v298 = vunpack.c.h.s8.bf16 %v174
    %v299 = vunpack.c.h.s8.bf16 %v175
    %v300 = vunpack.c.h.s8.bf16 %v176
    %v301 = vunpack.c.l.s8.bf16 %v177
    %v302 = vunpack.c.l.s8.bf16 %v178
    %v303 = vunpack.c.l.s8.bf16 %v179
    %v304 = vunpack.c.l.s8.bf16 %v180
    %v305 = vunpack.c.h.s8.bf16 %v177
    %v306 = vunpack.c.h.s8.bf16 %v178
    %v307 = vunpack.c.h.s8.bf16 %v179
    %v308 = vunpack.c.h.s8.bf16 %v180
    %v313 = vunpack.c.l.b16 %v113
    %v314 = vunpack.c.h.b16 %v113
    %v315 = vunpack.c.l.b16 %v114
    %v316 = vunpack.c.h.b16 %v114
    %v317 = vunpack.c.l.b16 %v115
    %v318 = vunpack.c.h.b16 %v115
    %v319 = vunpack.c.l.b16 %v116
    %v320 = vunpack.c.h.b16 %v116
    %v321 = vpack.c.b16 %v317, %v313
    %v322 = vpack.c.b16 %v318, %v314
    %v323 = vpack.c.b16 %v319, %v315
    %v324 = vpack.c.b16 %v320, %v316
    %329 = vmatprep.subr.bf16.mxu0 %v210
    %330 = vmatpush1.bf16.xpose.msra.mxu0 %v209
    %331 = vmatprep.subr.bf16.mxu0 %v206
    %332 = vmatpush1.bf16.xpose.msra.mxu0 %v205
    %333 = vmatprep.subr.bf16.mxu0 %v202
    %334 = vmatpush1.bf16.xpose.msra.mxu0 %v201
    %335 = vmatprep.subr.bf16.mxu0 %v198
    %336 = vmatpush1.bf16.xpose.msra.mxu0 %v197
    %337 = vmatprep.subr.bf16.mxu0 %v194
    %338 = vmatpush1.bf16.xpose.msra.mxu0 %v193
    %339 = vmatprep.subr.bf16.mxu0 %v190
    %340 = vmatpush1.bf16.xpose.msra.mxu0 %v189
    %341 = vmatprep.subr.bf16.mxu0 %v186
    %342 = vmatpush1.bf16.xpose.msra.mxu0 %v185
    %343 = vmatprep.subr.bf16.mxu0 %v182
    %344 = vmatpush1.bf16.xpose.msra.mxu0 %v181
    %345 = vmatprep.subr.bf16.mxu0 %v242
    %346 = vmatpush2.bf16.xpose.msra.mxu0 %v241
    %347 = vmatprep.subr.bf16.mxu0 %v238
    %348 = vmatpush2.bf16.xpose.msra.mxu0 %v237
    %349 = vmatprep.subr.bf16.mxu0 %v234
    %350 = vmatpush2.bf16.xpose.msra.mxu0 %v233
    %351 = vmatprep.subr.bf16.mxu0 %v230
    %352 = vmatpush2.bf16.xpose.msra.mxu0 %v229
    %353 = vmatprep.subr.bf16.mxu0 %v226
    %354 = vmatpush2.bf16.xpose.msra.mxu0 %v225
    %355 = vmatprep.subr.bf16.mxu0 %v222
    %356 = vmatpush2.bf16.xpose.msra.mxu0 %v221
    %357 = vmatprep.subr.bf16.mxu0 %v218
    %358 = vmatpush2.bf16.xpose.msra.mxu0 %v217
    %359 = vmatprep.subr.bf16.mxu0 %v214
    %360 = vmatpush2.bf16.xpose.msra.mxu0 %v213
    %361 = vmatprep.mubr.bf16.mxu0 %v322
    %362 = vmatmul.mubr.bf16.gmra.mxu0 %v321
    %v363 = vpop.f32.mrf.mxu0
    %v364 = vadd.f32 0.0, %v363
    %v365 = vpop.f32.mrf.mxu0
    %v366 = vadd.f32 0.0, %v365
    %v367 = vpop.f32.mrf.mxu0
    %v368 = vadd.f32 0.0, %v367
    %v369 = vpop.f32.mrf.mxu0
    %v370 = vadd.f32 0.0, %v369
    %371 = vdwg.mxu0
    %372 = vmatprep.subr.bf16.mxu0 %v212
    %373 = vmatpush1.bf16.xpose.msra.mxu0 %v211
    %374 = vmatprep.subr.bf16.mxu0 %v208
    %375 = vmatpush1.bf16.xpose.msra.mxu0 %v207
    %376 = vmatprep.subr.bf16.mxu0 %v204
    %377 = vmatpush1.bf16.xpose.msra.mxu0 %v203
    %378 = vmatprep.subr.bf16.mxu0 %v200
    %379 = vmatpush1.bf16.xpose.msra.mxu0 %v199
    %380 = vmatprep.subr.bf16.mxu0 %v196
    %381 = vmatpush1.bf16.xpose.msra.mxu0 %v195
    %382 = vmatprep.subr.bf16.mxu0 %v192
    %383 = vmatpush1.bf16.xpose.msra.mxu0 %v191
    %384 = vmatprep.subr.bf16.mxu0 %v188
    %385 = vmatpush1.bf16.xpose.msra.mxu0 %v187
    %386 = vmatprep.subr.bf16.mxu0 %v184
    %387 = vmatpush1.bf16.xpose.msra.mxu0 %v183
    %388 = vmatprep.subr.bf16.mxu0 %v244
    %389 = vmatpush2.bf16.xpose.msra.mxu0 %v243
    %390 = vmatprep.subr.bf16.mxu0 %v240
    %391 = vmatpush2.bf16.xpose.msra.mxu0 %v239
    %392 = vmatprep.subr.bf16.mxu0 %v236
    %393 = vmatpush2.bf16.xpose.msra.mxu0 %v235
    %394 = vmatprep.subr.bf16.mxu0 %v232
    %395 = vmatpush2.bf16.xpose.msra.mxu0 %v231
    %396 = vmatprep.subr.bf16.mxu0 %v228
    %397 = vmatpush2.bf16.xpose.msra.mxu0 %v227
    %398 = vmatprep.subr.bf16.mxu0 %v224
    %399 = vmatpush2.bf16.xpose.msra.mxu0 %v223
    %400 = vmatprep.subr.bf16.mxu0 %v220
    %401 = vmatpush2.bf16.xpose.msra.mxu0 %v219
    %402 = vmatprep.subr.bf16.mxu0 %v216
    %403 = vmatpush2.bf16.xpose.msra.mxu0 %v215
    %404 = vmatprep.mubr.bf16.mxu0 %v324
    %405 = vmatmul.mubr.bf16.gmra.mxu0 %v323
    %v406 = vpop.f32.mrf.mxu0
    %v407 = vadd.f32 %v364, %v406
    %v408 = vpop.f32.mrf.mxu0
    %v409 = vadd.f32 %v366, %v408
    %v410 = vpop.f32.mrf.mxu0
    %v411 = vadd.f32 %v368, %v410
    %v412 = vpop.f32.mrf.mxu0
    %v413 = vadd.f32 %v370, %v412
    %414 = vdwg.mxu0
    %415 = vmatprep.subr.bf16.mxu0 %v274
    %416 = vmatpush1.bf16.xpose.msra.mxu0 %v273
    %417 = vmatprep.subr.bf16.mxu0 %v270
    %418 = vmatpush1.bf16.xpose.msra.mxu0 %v269
    %419 = vmatprep.subr.bf16.mxu0 %v266
    %420 = vmatpush1.bf16.xpose.msra.mxu0 %v265
    %421 = vmatprep.subr.bf16.mxu0 %v262
    %422 = vmatpush1.bf16.xpose.msra.mxu0 %v261
    %423 = vmatprep.subr.bf16.mxu0 %v258
    %424 = vmatpush1.bf16.xpose.msra.mxu0 %v257
    %425 = vmatprep.subr.bf16.mxu0 %v254
    %426 = vmatpush1.bf16.xpose.msra.mxu0 %v253
    %427 = vmatprep.subr.bf16.mxu0 %v250
    %428 = vmatpush1.bf16.xpose.msra.mxu0 %v249
    %429 = vmatprep.subr.bf16.mxu0 %v246
    %430 = vmatpush1.bf16.xpose.msra.mxu0 %v245
    %431 = vmatprep.subr.bf16.mxu0 %v306
    %432 = vmatpush2.bf16.xpose.msra.mxu0 %v305
    %433 = vmatprep.subr.bf16.mxu0 %v302
    %434 = vmatpush2.bf16.xpose.msra.mxu0 %v301
    %435 = vmatprep.subr.bf16.mxu0 %v298
    %436 = vmatpush2.bf16.xpose.msra.mxu0 %v297
    %437 = vmatprep.subr.bf16.mxu0 %v294
    %438 = vmatpush2.bf16.xpose.msra.mxu0 %v293
    %439 = vmatprep.subr.bf16.mxu0 %v290
    %440 = vmatpush2.bf16.xpose.msra.mxu0 %v289
    %441 = vmatprep.subr.bf16.mxu0 %v286
    %442 = vmatpush2.bf16.xpose.msra.mxu0 %v285
    %443 = vmatprep.subr.bf16.mxu0 %v282
    %444 = vmatpush2.bf16.xpose.msra.mxu0 %v281
    %445 = vmatprep.subr.bf16.mxu0 %v278
    %446 = vmatpush2.bf16.xpose.msra.mxu0 %v277
    %447 = vmatprep.mubr.bf16.mxu0 %v322
    %448 = vmatmul.mubr.bf16.gmra.mxu0 %v321
    %v449 = vpop.f32.mrf.mxu0
    %v450 = vadd.f32 0.0, %v449
    %v451 = vpop.f32.mrf.mxu0
    %v452 = vadd.f32 0.0, %v451
    %v453 = vpop.f32.mrf.mxu0
    %v454 = vadd.f32 0.0, %v453
    %v455 = vpop.f32.mrf.mxu0
    %v456 = vadd.f32 0.0, %v455
    %457 = vdwg.mxu0
    %458 = vmatprep.subr.bf16.mxu0 %v276
    %459 = vmatpush1.bf16.xpose.msra.mxu0 %v275
    %460 = vmatprep.subr.bf16.mxu0 %v272
    %461 = vmatpush1.bf16.xpose.msra.mxu0 %v271
    %462 = vmatprep.subr.bf16.mxu0 %v268
    %463 = vmatpush1.bf16.xpose.msra.mxu0 %v267
    %464 = vmatprep.subr.bf16.mxu0 %v264
    %465 = vmatpush1.bf16.xpose.msra.mxu0 %v263
    %466 = vmatprep.subr.bf16.mxu0 %v260
    %467 = vmatpush1.bf16.xpose.msra.mxu0 %v259
    %468 = vmatprep.subr.bf16.mxu0 %v256
    %469 = vmatpush1.bf16.xpose.msra.mxu0 %v255
    %470 = vmatprep.subr.bf16.mxu0 %v252
    %471 = vmatpush1.bf16.xpose.msra.mxu0 %v251
    %472 = vmatprep.subr.bf16.mxu0 %v248
    %473 = vmatpush1.bf16.xpose.msra.mxu0 %v247
    %474 = vmatprep.subr.bf16.mxu0 %v308
    %475 = vmatpush2.bf16.xpose.msra.mxu0 %v307
    %476 = vmatprep.subr.bf16.mxu0 %v304
    %477 = vmatpush2.bf16.xpose.msra.mxu0 %v303
    %478 = vmatprep.subr.bf16.mxu0 %v300
    %479 = vmatpush2.bf16.xpose.msra.mxu0 %v299
    %480 = vmatprep.subr.bf16.mxu0 %v296
    %481 = vmatpush2.bf16.xpose.msra.mxu0 %v295
    %482 = vmatprep.subr.bf16.mxu0 %v292
    %483 = vmatpush2.bf16.xpose.msra.mxu0 %v291
    %484 = vmatprep.subr.bf16.mxu0 %v288
    %485 = vmatpush2.bf16.xpose.msra.mxu0 %v287
    %486 = vmatprep.subr.bf16.mxu0 %v284
    %487 = vmatpush2.bf16.xpose.msra.mxu0 %v283
    %488 = vmatprep.subr.bf16.mxu0 %v280
    %489 = vmatpush2.bf16.xpose.msra.mxu0 %v279
    %490 = vmatprep.mubr.bf16.mxu0 %v324
    %491 = vmatmul.mubr.bf16.gmra.mxu0 %v323
    %v492 = vpop.f32.mrf.mxu0
    %v493 = vadd.f32 %v450, %v492
    %v494 = vpop.f32.mrf.mxu0
    %v495 = vadd.f32 %v452, %v494
    %v496 = vpop.f32.mrf.mxu0
    %v497 = vadd.f32 %v454, %v496
    %v498 = vpop.f32.mrf.mxu0
    %v499 = vadd.f32 %v456, %v498
    %500 = vdwg.mxu0
    %v501 = vld [vmem:[#allocation7] sm:$0xf]
    %v503 = vlaneseq
    %v504 = vshrl.u32 %v503, 7
    %v505 = vsub.s32 0, %v504
    %v506 = vrot.slane %v501, %v505
    %v507 = vlaneseq
    %v508 = vshrl.u32 %v507, 7
    %v509 = vsub.s32 1, %v508
    %v510 = vrot.slane %v501, %v509
    %v511 = vlaneseq
    %v512 = vshrl.u32 %v511, 7
    %v513 = vsub.s32 2, %v512
    %v514 = vrot.slane %v501, %v513
    %v515 = vlaneseq
    %v516 = vshrl.u32 %v515, 7
    %v517 = vsub.s32 3, %v516
    %v518 = vrot.slane %v501, %v517
    %v523 = vmul.f32 %v407, %v506
    %v524 = vmul.f32 %v409, %v510
    %v525 = vmul.f32 %v493, %v514
    %v526 = vmul.f32 %v495, %v518
    %v527 = vmul.f32 %v411, %v506
    %v528 = vmul.f32 %v413, %v510
    %v529 = vmul.f32 %v497, %v514
    %v530 = vmul.f32 %v499, %v518
    %v531 = vld [vmem:[%s108] sm:$0xf]
    %v533 = vlaneseq
    %v534 = vshrl.u32 %v533, 7
    %v535 = vsub.s32 0, %v534
    %v536 = vrot.slane %v531, %v535
    %v537 = vlaneseq
    %v538 = vshrl.u32 %v537, 7
    %v539 = vsub.s32 1, %v538
    %v540 = vrot.slane %v531, %v539
    %v541 = vlaneseq
    %v542 = vshrl.u32 %v541, 7
    %v543 = vsub.s32 2, %v542
    %v544 = vrot.slane %v531, %v543
    %v545 = vlaneseq
    %v546 = vshrl.u32 %v545, 7
    %v547 = vsub.s32 3, %v546
    %v548 = vrot.slane %v531, %v547
    %v553 = vadd.f32 %v523, %v536
    %v554 = vadd.f32 %v524, %v540
    %v555 = vadd.f32 %v525, %v544
    %v556 = vadd.f32 %v526, %v548
    %v557 = vadd.f32 %v527, %v536
    %v558 = vadd.f32 %v528, %v540
    %v559 = vadd.f32 %v529, %v544
    %v560 = vadd.f32 %v530, %v548
    %v561 = vmax.f32 %v553, 0.0
    %v562 = vmax.f32 %v554, 0.0
    %v563 = vmax.f32 %v555, 0.0
    %v564 = vmax.f32 %v556, 0.0
    %v565 = vmax.f32 %v557, 0.0
    %v566 = vmax.f32 %v558, 0.0
    %v567 = vmax.f32 %v559, 0.0
    %v568 = vmax.f32 %v560, 0.0
    %v569 = vpack.c.bf16 %v565, %v561
    %v570 = vpack.c.bf16 %v566, %v562
    %v571 = vpack.c.bf16 %v567, %v563
    %v572 = vpack.c.bf16 %v568, %v564
    %v573 = vld [vmem:[#allocation8] sm:$0xff]
    %v574 = vld [vmem:[#allocation8 + $0x8] sm:$0xff]
    %v575 = vld [vmem:[#allocation8 + $0x10] sm:$0xff]
    %v576 = vld [vmem:[#allocation8 + $0x18] sm:$0xff]
    %v577 = vld [vmem:[#allocation8 + $0x20] sm:$0xff]
    %v578 = vld [vmem:[#allocation8 + $0x28] sm:$0xff]
    %v579 = vld [vmem:[#allocation8 + $0x30] sm:$0xff]
    %v580 = vld [vmem:[#allocation8 + $0x38] sm:$0xff]
    %v581 = vld [vmem:[#allocation8 + $0x40] sm:$0xff]
    %v582 = vld [vmem:[#allocation8 + $0x48] sm:$0xff]
    %v583 = vld [vmem:[#allocation8 + $0x50] sm:$0xff]
    %v584 = vld [vmem:[#allocation8 + $0x58] sm:$0xff]
    %v585 = vld [vmem:[#allocation8 + $0x60] sm:$0xff]
    %v586 = vld [vmem:[#allocation8 + $0x68] sm:$0xff]
    %v587 = vld [vmem:[#allocation8 + $0x70] sm:$0xff]
    %v588 = vld [vmem:[#allocation8 + $0x78] sm:$0xff]
    %v589 = vld [vmem:[#allocation8 + $0x80] sm:$0xff]
    %v590 = vld [vmem:[#allocation8 + $0x88] sm:$0xff]
    %v591 = vld [vmem:[#allocation8 + $0x90] sm:$0xff]
    %v592 = vld [vmem:[#allocation8 + $0x98] sm:$0xff]
    %v593 = vld [vmem:[#allocation8 + $0xa0] sm:$0xff]
    %v594 = vld [vmem:[#allocation8 + $0xa8] sm:$0xff]
    %v595 = vld [vmem:[#allocation8 + $0xb0] sm:$0xff]
    %v596 = vld [vmem:[#allocation8 + $0xb8] sm:$0xff]
    %v597 = vld [vmem:[#allocation8 + $0xc0] sm:$0xff]
    %v598 = vld [vmem:[#allocation8 + $0xc8] sm:$0xff]
    %v599 = vld [vmem:[#allocation8 + $0xd0] sm:$0xff]
    %v600 = vld [vmem:[#allocation8 + $0xd8] sm:$0xff]
    %v601 = vld [vmem:[#allocation8 + $0xe0] sm:$0xff]
    %v602 = vld [vmem:[#allocation8 + $0xe8] sm:$0xff]
    %v603 = vld [vmem:[#allocation8 + $0xf0] sm:$0xff]
    %v604 = vld [vmem:[#allocation8 + $0xf8] sm:$0xff]
    %v605 = vld [vmem:[#allocation8 + $0x100] sm:$0xff]
    %v606 = vld [vmem:[#allocation8 + $0x108] sm:$0xff]
    %v607 = vld [vmem:[#allocation8 + $0x110] sm:$0xff]
    %v608 = vld [vmem:[#allocation8 + $0x118] sm:$0xff]
    %v609 = vld [vmem:[#allocation8 + $0x120] sm:$0xff]
    %v610 = vld [vmem:[#allocation8 + $0x128] sm:$0xff]
    %v611 = vld [vmem:[#allocation8 + $0x130] sm:$0xff]
    %v612 = vld [vmem:[#allocation8 + $0x138] sm:$0xff]
    %v613 = vld [vmem:[#allocation8 + $0x140] sm:$0xff]
    %v614 = vld [vmem:[#allocation8 + $0x148] sm:$0xff]
    %v615 = vld [vmem:[#allocation8 + $0x150] sm:$0xff]
    %v616 = vld [vmem:[#allocation8 + $0x158] sm:$0xff]
    %v617 = vld [vmem:[#allocation8 + $0x160] sm:$0xff]
    %v618 = vld [vmem:[#allocation8 + $0x168] sm:$0xff]
    %v619 = vld [vmem:[#allocation8 + $0x170] sm:$0xff]
    %v620 = vld [vmem:[#allocation8 + $0x178] sm:$0xff]
    %v621 = vld [vmem:[#allocation8 + $0x180] sm:$0xff]
    %v622 = vld [vmem:[#allocation8 + $0x188] sm:$0xff]
    %v623 = vld [vmem:[#allocation8 + $0x190] sm:$0xff]
    %v624 = vld [vmem:[#allocation8 + $0x198] sm:$0xff]
    %v625 = vld [vmem:[#allocation8 + $0x1a0] sm:$0xff]
    %v626 = vld [vmem:[#allocation8 + $0x1a8] sm:$0xff]
    %v627 = vld [vmem:[#allocation8 + $0x1b0] sm:$0xff]
    %v628 = vld [vmem:[#allocation8 + $0x1b8] sm:$0xff]
    %v629 = vld [vmem:[#allocation8 + $0x1c0] sm:$0xff]
    %v630 = vld [vmem:[#allocation8 + $0x1c8] sm:$0xff]
    %v631 = vld [vmem:[#allocation8 + $0x1d0] sm:$0xff]
    %v632 = vld [vmem:[#allocation8 + $0x1d8] sm:$0xff]
    %v633 = vld [vmem:[#allocation8 + $0x1e0] sm:$0xff]
    %v634 = vld [vmem:[#allocation8 + $0x1e8] sm:$0xff]
    %v635 = vld [vmem:[#allocation8 + $0x1f0] sm:$0xff]
    %v636 = vld [vmem:[#allocation8 + $0x1f8] sm:$0xff]
    %v637 = vunpack.c.l.s8.bf16 %v573
    %v638 = vunpack.c.l.s8.bf16 %v574
    %v639 = vunpack.c.l.s8.bf16 %v575
    %v640 = vunpack.c.l.s8.bf16 %v576
    %v641 = vunpack.c.h.s8.bf16 %v573
    %v642 = vunpack.c.h.s8.bf16 %v574
    %v643 = vunpack.c.h.s8.bf16 %v575
    %v644 = vunpack.c.h.s8.bf16 %v576
    %v645 = vunpack.c.l.s8.bf16 %v577
    %v646 = vunpack.c.l.s8.bf16 %v578
    %v647 = vunpack.c.l.s8.bf16 %v579
    %v648 = vunpack.c.l.s8.bf16 %v580
    %v649 = vunpack.c.h.s8.bf16 %v577
    %v650 = vunpack.c.h.s8.bf16 %v578
    %v651 = vunpack.c.h.s8.bf16 %v579
    %v652 = vunpack.c.h.s8.bf16 %v580
    %v653 = vunpack.c.l.s8.bf16 %v581
    %v654 = vunpack.c.l.s8.bf16 %v582
    %v655 = vunpack.c.l.s8.bf16 %v583
    %v656 = vunpack.c.l.s8.bf16 %v584
    %v657 = vunpack.c.h.s8.bf16 %v581
    %v658 = vunpack.c.h.s8.bf16 %v582
    %v659 = vunpack.c.h.s8.bf16 %v583
    %v660 = vunpack.c.h.s8.bf16 %v584
    %v661 = vunpack.c.l.s8.bf16 %v585
    %v662 = vunpack.c.l.s8.bf16 %v586
    %v663 = vunpack.c.l.s8.bf16 %v587
    %v664 = vunpack.c.l.s8.bf16 %v588
    %v665 = vunpack.c.h.s8.bf16 %v585
    %v666 = vunpack.c.h.s8.bf16 %v586
    %v667 = vunpack.c.h.s8.bf16 %v587
    %v668 = vunpack.c.h.s8.bf16 %v588
    %v669 = vunpack.c.l.s8.bf16 %v589
    %v670 = vunpack.c.l.s8.bf16 %v590
    %v671 = vunpack.c.l.s8.bf16 %v591
    %v672 = vunpack.c.l.s8.bf16 %v592
    %v673 = vunpack.c.h.s8.bf16 %v589
    %v674 = vunpack.c.h.s8.bf16 %v590
    %v675 = vunpack.c.h.s8.bf16 %v591
    %v676 = vunpack.c.h.s8.bf16 %v592
    %v677 = vunpack.c.l.s8.bf16 %v593
    %v678 = vunpack.c.l.s8.bf16 %v594
    %v679 = vunpack.c.l.s8.bf16 %v595
    %v680 = vunpack.c.l.s8.bf16 %v596
    %v681 = vunpack.c.h.s8.bf16 %v593
    %v682 = vunpack.c.h.s8.bf16 %v594
    %v683 = vunpack.c.h.s8.bf16 %v595
    %v684 = vunpack.c.h.s8.bf16 %v596
    %v685 = vunpack.c.l.s8.bf16 %v597
    %v686 = vunpack.c.l.s8.bf16 %v598
    %v687 = vunpack.c.l.s8.bf16 %v599
    %v688 = vunpack.c.l.s8.bf16 %v600
    %v689 = vunpack.c.h.s8.bf16 %v597
    %v690 = vunpack.c.h.s8.bf16 %v598
    %v691 = vunpack.c.h.s8.bf16 %v599
    %v692 = vunpack.c.h.s8.bf16 %v600
    %v693 = vunpack.c.l.s8.bf16 %v601
    %v694 = vunpack.c.l.s8.bf16 %v602
    %v695 = vunpack.c.l.s8.bf16 %v603
    %v696 = vunpack.c.l.s8.bf16 %v604
    %v697 = vunpack.c.h.s8.bf16 %v601
    %v698 = vunpack.c.h.s8.bf16 %v602
    %v699 = vunpack.c.h.s8.bf16 %v603
    %v700 = vunpack.c.h.s8.bf16 %v604
    %v701 = vunpack.c.l.s8.bf16 %v605
    %v702 = vunpack.c.l.s8.bf16 %v606
    %v703 = vunpack.c.l.s8.bf16 %v607
    %v704 = vunpack.c.l.s8.bf16 %v608
    %v705 = vunpack.c.h.s8.bf16 %v605
    %v706 = vunpack.c.h.s8.bf16 %v606
    %v707 = vunpack.c.h.s8.bf16 %v607
    %v708 = vunpack.c.h.s8.bf16 %v608
    %v709 = vunpack.c.l.s8.bf16 %v609
    %v710 = vunpack.c.l.s8.bf16 %v610
    %v711 = vunpack.c.l.s8.bf16 %v611
    %v712 = vunpack.c.l.s8.bf16 %v612
    %v713 = vunpack.c.h.s8.bf16 %v609
    %v714 = vunpack.c.h.s8.bf16 %v610
    %v715 = vunpack.c.h.s8.bf16 %v611
    %v716 = vunpack.c.h.s8.bf16 %v612
    %v717 = vunpack.c.l.s8.bf16 %v613
    %v718 = vunpack.c.l.s8.bf16 %v614
    %v719 = vunpack.c.l.s8.bf16 %v615
    %v720 = vunpack.c.l.s8.bf16 %v616
    %v721 = vunpack.c.h.s8.bf16 %v613
    %v722 = vunpack.c.h.s8.bf16 %v614
    %v723 = vunpack.c.h.s8.bf16 %v615
    %v724 = vunpack.c.h.s8.bf16 %v616
    %v725 = vunpack.c.l.s8.bf16 %v617
    %v726 = vunpack.c.l.s8.bf16 %v618
    %v727 = vunpack.c.l.s8.bf16 %v619
    %v728 = vunpack.c.l.s8.bf16 %v620
    %v729 = vunpack.c.h.s8.bf16 %v617
    %v730 = vunpack.c.h.s8.bf16 %v618
    %v731 = vunpack.c.h.s8.bf16 %v619
    %v732 = vunpack.c.h.s8.bf16 %v620
    %v733 = vunpack.c.l.s8.bf16 %v621
    %v734 = vunpack.c.l.s8.bf16 %v622
    %v735 = vunpack.c.l.s8.bf16 %v623
    %v736 = vunpack.c.l.s8.bf16 %v624
    %v737 = vunpack.c.h.s8.bf16 %v621
    %v738 = vunpack.c.h.s8.bf16 %v622
    %v739 = vunpack.c.h.s8.bf16 %v623
    %v740 = vunpack.c.h.s8.bf16 %v624
    %v741 = vunpack.c.l.s8.bf16 %v625
    %v742 = vunpack.c.l.s8.bf16 %v626
    %v743 = vunpack.c.l.s8.bf16 %v627
    %v744 = vunpack.c.l.s8.bf16 %v628
    %v745 = vunpack.c.h.s8.bf16 %v625
    %v746 = vunpack.c.h.s8.bf16 %v626
    %v747 = vunpack.c.h.s8.bf16 %v627
    %v748 = vunpack.c.h.s8.bf16 %v628
    %v749 = vunpack.c.l.s8.bf16 %v629
    %v750 = vunpack.c.l.s8.bf16 %v630
    %v751 = vunpack.c.l.s8.bf16 %v631
    %v752 = vunpack.c.l.s8.bf16 %v632
    %v753 = vunpack.c.h.s8.bf16 %v629
    %v754 = vunpack.c.h.s8.bf16 %v630
    %v755 = vunpack.c.h.s8.bf16 %v631
    %v756 = vunpack.c.h.s8.bf16 %v632
    %v757 = vunpack.c.l.s8.bf16 %v633
    %v758 = vunpack.c.l.s8.bf16 %v634
    %v759 = vunpack.c.l.s8.bf16 %v635
    %v760 = vunpack.c.l.s8.bf16 %v636
    %v761 = vunpack.c.h.s8.bf16 %v633
    %v762 = vunpack.c.h.s8.bf16 %v634
    %v763 = vunpack.c.h.s8.bf16 %v635
    %v764 = vunpack.c.h.s8.bf16 %v636
    %765 = vmatprep.subr.bf16.mxu0 %v666
    %766 = vmatpush1.bf16.msra.mxu0 %v665
    %767 = vmatprep.subr.bf16.mxu0 %v662
    %768 = vmatpush1.bf16.msra.mxu0 %v661
    %769 = vmatprep.subr.bf16.mxu0 %v658
    %770 = vmatpush1.bf16.msra.mxu0 %v657
    %771 = vmatprep.subr.bf16.mxu0 %v654
    %772 = vmatpush1.bf16.msra.mxu0 %v653
    %773 = vmatprep.subr.bf16.mxu0 %v650
    %774 = vmatpush1.bf16.msra.mxu0 %v649
    %775 = vmatprep.subr.bf16.mxu0 %v646
    %776 = vmatpush1.bf16.msra.mxu0 %v645
    %777 = vmatprep.subr.bf16.mxu0 %v642
    %778 = vmatpush1.bf16.msra.mxu0 %v641
    %779 = vmatprep.subr.bf16.mxu0 %v638
    %780 = vmatpush1.bf16.msra.mxu0 %v637
    %781 = vmatprep.subr.bf16.mxu0 %v698
    %782 = vmatpush2.bf16.msra.mxu0 %v697
    %783 = vmatprep.subr.bf16.mxu0 %v694
    %784 = vmatpush2.bf16.msra.mxu0 %v693
    %785 = vmatprep.subr.bf16.mxu0 %v690
    %786 = vmatpush2.bf16.msra.mxu0 %v689
    %787 = vmatprep.subr.bf16.mxu0 %v686
    %788 = vmatpush2.bf16.msra.mxu0 %v685
    %789 = vmatprep.subr.bf16.mxu0 %v682
    %790 = vmatpush2.bf16.msra.mxu0 %v681
    %791 = vmatprep.subr.bf16.mxu0 %v678
    %792 = vmatpush2.bf16.msra.mxu0 %v677
    %793 = vmatprep.subr.bf16.mxu0 %v674
    %794 = vmatpush2.bf16.msra.mxu0 %v673
    %795 = vmatprep.subr.bf16.mxu0 %v670
    %796 = vmatpush2.bf16.msra.mxu0 %v669
    %797 = vmatprep.mubr.bf16.mxu0 %v570
    %798 = vmatmul.mubr.bf16.gmra.mxu0 %v569
    %v799 = vpop.f32.mrf.mxu0
    %v800 = vadd.f32 0.0, %v799
    %v801 = vpop.f32.mrf.mxu0
    %v802 = vadd.f32 0.0, %v801
    %v803 = vpop.f32.mrf.mxu0
    %v804 = vadd.f32 0.0, %v803
    %v805 = vpop.f32.mrf.mxu0
    %v806 = vadd.f32 0.0, %v805
    %807 = vdwg.mxu0
    %808 = vmatprep.subr.bf16.mxu0 %v730
    %809 = vmatpush1.bf16.msra.mxu0 %v729
    %810 = vmatprep.subr.bf16.mxu0 %v726
    %811 = vmatpush1.bf16.msra.mxu0 %v725
    %812 = vmatprep.subr.bf16.mxu0 %v722
    %813 = vmatpush1.bf16.msra.mxu0 %v721
    %814 = vmatprep.subr.bf16.mxu0 %v718
    %815 = vmatpush1.bf16.msra.mxu0 %v717
    %816 = vmatprep.subr.bf16.mxu0 %v714
    %817 = vmatpush1.bf16.msra.mxu0 %v713
    %818 = vmatprep.subr.bf16.mxu0 %v710
    %819 = vmatpush1.bf16.msra.mxu0 %v709
    %820 = vmatprep.subr.bf16.mxu0 %v706
    %821 = vmatpush1.bf16.msra.mxu0 %v705
    %822 = vmatprep.subr.bf16.mxu0 %v702
    %823 = vmatpush1.bf16.msra.mxu0 %v701
    %824 = vmatprep.subr.bf16.mxu0 %v762
    %825 = vmatpush2.bf16.msra.mxu0 %v761
    %826 = vmatprep.subr.bf16.mxu0 %v758
    %827 = vmatpush2.bf16.msra.mxu0 %v757
    %828 = vmatprep.subr.bf16.mxu0 %v754
    %829 = vmatpush2.bf16.msra.mxu0 %v753
    %830 = vmatprep.subr.bf16.mxu0 %v750
    %831 = vmatpush2.bf16.msra.mxu0 %v749
    %832 = vmatprep.subr.bf16.mxu0 %v746
    %833 = vmatpush2.bf16.msra.mxu0 %v745
    %834 = vmatprep.subr.bf16.mxu0 %v742
    %835 = vmatpush2.bf16.msra.mxu0 %v741
    %836 = vmatprep.subr.bf16.mxu0 %v738
    %837 = vmatpush2.bf16.msra.mxu0 %v737
    %838 = vmatprep.subr.bf16.mxu0 %v734
    %839 = vmatpush2.bf16.msra.mxu0 %v733
    %840 = vmatprep.mubr.bf16.mxu0 %v572
    %841 = vmatmul.mubr.bf16.gmra.mxu0 %v571
    %v842 = vpop.f32.mrf.mxu0
    %v843 = vadd.f32 %v800, %v842
    %v844 = vpop.f32.mrf.mxu0
    %v845 = vadd.f32 %v802, %v844
    %v846 = vpop.f32.mrf.mxu0
    %v847 = vadd.f32 %v804, %v846
    %v848 = vpop.f32.mrf.mxu0
    %v849 = vadd.f32 %v806, %v848
    %850 = vdwg.mxu0
    %851 = vmatprep.subr.bf16.mxu0 %v668
    %852 = vmatpush1.bf16.msra.mxu0 %v667
    %853 = vmatprep.subr.bf16.mxu0 %v664
    %854 = vmatpush1.bf16.msra.mxu0 %v663
    %855 = vmatprep.subr.bf16.mxu0 %v660
    %856 = vmatpush1.bf16.msra.mxu0 %v659
    %857 = vmatprep.subr.bf16.mxu0 %v656
    %858 = vmatpush1.bf16.msra.mxu0 %v655
    %859 = vmatprep.subr.bf16.mxu0 %v652
    %860 = vmatpush1.bf16.msra.mxu0 %v651
    %861 = vmatprep.subr.bf16.mxu0 %v648
    %862 = vmatpush1.bf16.msra.mxu0 %v647
    %863 = vmatprep.subr.bf16.mxu0 %v644
    %864 = vmatpush1.bf16.msra.mxu0 %v643
    %865 = vmatprep.subr.bf16.mxu0 %v640
    %866 = vmatpush1.bf16.msra.mxu0 %v639
    %867 = vmatprep.subr.bf16.mxu0 %v700
    %868 = vmatpush2.bf16.msra.mxu0 %v699
    %869 = vmatprep.subr.bf16.mxu0 %v696
    %870 = vmatpush2.bf16.msra.mxu0 %v695
    %871 = vmatprep.subr.bf16.mxu0 %v692
    %872 = vmatpush2.bf16.msra.mxu0 %v691
    %873 = vmatprep.subr.bf16.mxu0 %v688
    %874 = vmatpush2.bf16.msra.mxu0 %v687
    %875 = vmatprep.subr.bf16.mxu0 %v684
    %876 = vmatpush2.bf16.msra.mxu0 %v683
    %877 = vmatprep.subr.bf16.mxu0 %v680
    %878 = vmatpush2.bf16.msra.mxu0 %v679
    %879 = vmatprep.subr.bf16.mxu0 %v676
    %880 = vmatpush2.bf16.msra.mxu0 %v675
    %881 = vmatprep.subr.bf16.mxu0 %v672
    %882 = vmatpush2.bf16.msra.mxu0 %v671
    %883 = vmatprep.mubr.bf16.mxu0 %v570
    %884 = vmatmul.mubr.bf16.gmra.mxu0 %v569
    %v885 = vpop.f32.mrf.mxu0
    %v886 = vadd.f32 0.0, %v885
    %v887 = vpop.f32.mrf.mxu0
    %v888 = vadd.f32 0.0, %v887
    %v889 = vpop.f32.mrf.mxu0
    %v890 = vadd.f32 0.0, %v889
    %v891 = vpop.f32.mrf.mxu0
    %v892 = vadd.f32 0.0, %v891
    %893 = vdwg.mxu0
    %894 = vmatprep.subr.bf16.mxu0 %v732
    %895 = vmatpush1.bf16.msra.mxu0 %v731
    %896 = vmatprep.subr.bf16.mxu0 %v728
    %897 = vmatpush1.bf16.msra.mxu0 %v727
    %898 = vmatprep.subr.bf16.mxu0 %v724
    %899 = vmatpush1.bf16.msra.mxu0 %v723
    %900 = vmatprep.subr.bf16.mxu0 %v720
    %901 = vmatpush1.bf16.msra.mxu0 %v719
    %902 = vmatprep.subr.bf16.mxu0 %v716
    %903 = vmatpush1.bf16.msra.mxu0 %v715
    %904 = vmatprep.subr.bf16.mxu0 %v712
    %905 = vmatpush1.bf16.msra.mxu0 %v711
    %906 = vmatprep.subr.bf16.mxu0 %v708
    %907 = vmatpush1.bf16.msra.mxu0 %v707
    %908 = vmatprep.subr.bf16.mxu0 %v704
    %909 = vmatpush1.bf16.msra.mxu0 %v703
    %910 = vmatprep.subr.bf16.mxu0 %v764
    %911 = vmatpush2.bf16.msra.mxu0 %v763
    %912 = vmatprep.subr.bf16.mxu0 %v760
    %913 = vmatpush2.bf16.msra.mxu0 %v759
    %914 = vmatprep.subr.bf16.mxu0 %v756
    %915 = vmatpush2.bf16.msra.mxu0 %v755
    %916 = vmatprep.subr.bf16.mxu0 %v752
    %917 = vmatpush2.bf16.msra.mxu0 %v751
    %918 = vmatprep.subr.bf16.mxu0 %v748
    %919 = vmatpush2.bf16.msra.mxu0 %v747
    %920 = vmatprep.subr.bf16.mxu0 %v744
    %921 = vmatpush2.bf16.msra.mxu0 %v743
    %922 = vmatprep.subr.bf16.mxu0 %v740
    %923 = vmatpush2.bf16.msra.mxu0 %v739
    %924 = vmatprep.subr.bf16.mxu0 %v736
    %925 = vmatpush2.bf16.msra.mxu0 %v735
    %926 = vmatprep.mubr.bf16.mxu0 %v572
    %927 = vmatmul.mubr.bf16.gmra.mxu0 %v571
    %v928 = vpop.f32.mrf.mxu0
    %v929 = vadd.f32 %v886, %v928
    %v930 = vpop.f32.mrf.mxu0
    %v931 = vadd.f32 %v888, %v930
    %v932 = vpop.f32.mrf.mxu0
    %v933 = vadd.f32 %v890, %v932
    %v934 = vpop.f32.mrf.mxu0
    %v935 = vadd.f32 %v892, %v934
    %936 = vdwg.mxu0
    %p937 = scmp.eq.s32.totalorder 0, 0
    // Predicated region
    $region38: #{tpu_custom_call.1} parent=1 // pred_check
      %p938 = pneg %p937
    $region39: #{tpu_custom_call.1} parent=1 // pred_check_branch
      %940 = sbr.rel (%p938) target = $region41
    $region40: #{tpu_custom_call.1} parent=1 // pred_region
      %941 = vst [vmem:[#allocation10] sm:$0xff] %v843
      %942 = vst [vmem:[#allocation10 + $0x8] sm:$0xff] %v845
      %943 = vst [vmem:[#allocation10 + $0x10] sm:$0xff] %v929
      %944 = vst [vmem:[#allocation10 + $0x18] sm:$0xff] %v931
      %945 = vst [vmem:[#allocation10 + $0x20] sm:$0xff] %v847
      %946 = vst [vmem:[#allocation10 + $0x28] sm:$0xff] %v849
      %947 = vst [vmem:[#allocation10 + $0x30] sm:$0xff] %v933
      %948 = vst [vmem:[#allocation10 + $0x38] sm:$0xff] %v935
    $region41: #{tpu_custom_call.1} parent=1 // pred_fallthru
      _
    %p949 = scmp.gt.s32.totalorder 0, 0
    // Predicated region
    $region42: #{tpu_custom_call.1} parent=1 // pred_check
      %p950 = pneg %p949
    $region43: #{tpu_custom_call.1} parent=1 // pred_check_branch
      %952 = sbr.rel (%p950) target = $region45
    $region44: #{tpu_custom_call.1} parent=1 // pred_region
      %v953 = vld [vmem:[#allocation10] sm:$0xff]
      %v954 = vld [vmem:[#allocation10 + $0x8] sm:$0xff]
      %v955 = vld [vmem:[#allocation10 + $0x10] sm:$0xff]
      %v956 = vld [vmem:[#allocation10 + $0x18] sm:$0xff]
      %v957 = vld [vmem:[#allocation10 + $0x20] sm:$0xff]
      %v958 = vld [vmem:[#allocation10 + $0x28] sm:$0xff]
      %v959 = vld [vmem:[#allocation10 + $0x30] sm:$0xff]
      %v960 = vld [vmem:[#allocation10 + $0x38] sm:$0xff]
      %v961 = vadd.f32 %v953, %v843
      %v962 = vadd.f32 %v954, %v845
      %v963 = vadd.f32 %v955, %v929
      %v964 = vadd.f32 %v956, %v931
      %v965 = vadd.f32 %v957, %v847
      %v966 = vadd.f32 %v958, %v849
      %v967 = vadd.f32 %v959, %v933
      %v968 = vadd.f32 %v960, %v935
      %969 = vst [vmem:[#allocation10] sm:$0xff] %v961
      %970 = vst [vmem:[#allocation10 + $0x8] sm:$0xff] %v962
      %971 = vst [vmem:[#allocation10 + $0x10] sm:$0xff] %v963
      %972 = vst [vmem:[#allocation10 + $0x18] sm:$0xff] %v964
      %973 = vst [vmem:[#allocation10 + $0x20] sm:$0xff] %v965
      %974 = vst [vmem:[#allocation10 + $0x28] sm:$0xff] %v966
      %975 = vst [vmem:[#allocation10 + $0x30] sm:$0xff] %v967
      %976 = vst [vmem:[#allocation10 + $0x38] sm:$0xff] %v968
    $region45: #{tpu_custom_call.1} parent=1 // pred_fallthru
      _
    // Predicated region
    $region46: #{tpu_custom_call.1} parent=1 // pred_check
      _
    $region47: #{tpu_custom_call.1} parent=1 // pred_check_branch
      %978 = sbr.rel (0) target = $region49
    $region48: #{tpu_custom_call.1} parent=1 // pred_region
      %s980 = ssub.s32 1024, 1024
      %981 = vsyncadd [#allocation4], %s980
      %s982 = sshll.u32 [#allocation10], 4
      %s983 = int_to_ptr.vmem [resolvable:$true] %s982
      %988 = dma.vmem_to_hbm [thread:$0]  %s983, 1024, %s5, [#allocation4], 512, 512, 32
    $region49: #{tpu_custom_call.1} parent=1 // pred_fallthru
      _
    // Predicated region
    $region50: #{tpu_custom_call.1} parent=1 // pred_check
      _
    $region51: #{tpu_custom_call.1} parent=1 // pred_check_branch
      %990 = sbr.rel (0) target = $region53
    $region52: #{tpu_custom_call.1} parent=1 // pred_region
      %991 = dma.done [#allocation4], 1024
    $region53: #{tpu_custom_call.1} parent=1 // pred_fallthru
      _
    %992 = vsyncpa [#allocation3], 1
    %993 = vsyncpa [#allocation6], 1
    %994 = vsyncpa [#allocation9], 1
    %995 = vsyncpa [#allocation4], 1

</llo_original>
